<compile_context>
chip_gen: v6e
topology: v6e:2x2x1
jax: 0.10.0
libtpu: 0.0.40
codegen_flags: <defaults>
</compile_context>

<pallas_src>
import jax
import jax.numpy as jnp
from jax.experimental import pallas as pl
from jax.experimental.pallas import tpu as pltpu

hidden_dim = 64
input_dim = 1
num_classes = 2

LANE = 128  # pad node / edge / hidden / class dims to the 128-lane vreg width


def _round_up(v, m):
    return ((v + m - 1) // m) * m


def graph_classifier_kernel(src_ref, dst_ref, ew_ref, x_ref,
                            w1_ref, b1_ref, w2_ref, b2_ref, w3_ref, b3_ref,
                            out_ref):
    NP = out_ref.shape[0]        # padded node count
    EP = src_ref.shape[0]        # padded edge count

    # ---- Fused weighted adjacency, built in-kernel from int32 indices ------
    # A[i, j] = sum_{e: dst[e]==i, src[e]==j} edge_weight[e]
    src = src_ref[...]                                   # (EP, 1) int32, pad = -1
    dst = dst_ref[...]                                   # (1, EP) int32, pad = -1
    ew = ew_ref[...]                                     # (EP, 1) f32,   pad = 0

    col_ids = jax.lax.broadcasted_iota(jnp.int32, (EP, NP), 1)
    gmat = (src == col_ids).astype(jnp.bfloat16) * ew.astype(jnp.bfloat16)  # (EP, NP)
    row_ids = jax.lax.broadcasted_iota(jnp.int32, (NP, EP), 0)
    dmat = (dst == row_ids).astype(jnp.bfloat16)                            # (NP, EP)

    # 0/1 and small-integer degrees are exact in bf16; accumulate in f32.
    a = jnp.dot(dmat, gmat, preferred_element_type=jnp.float32)             # (NP, NP)
    a_bf = a.astype(jnp.bfloat16)                                           # exact

    # ---- GCN layer 1: K == input_dim == 1  -> VPU outer product, no MXU ----
    h = x_ref[...] * w1_ref[...] + b1_ref[...]                              # (NP, HP)
    h1 = jnp.dot(a_bf, h.astype(jnp.bfloat16),
                 preferred_element_type=jnp.float32)                        # aggregate

    # ---- GCN layer 2 --------------------------------------------------------
    h = jnp.dot(h1, w2_ref[...], preferred_element_type=jnp.float32) + b2_ref[...]
    h2 = jnp.dot(a_bf, h.astype(jnp.bfloat16),
                 preferred_element_type=jnp.float32)

    # ---- Final Linear (lane-dense padded output: last dim == 128) ----------
    out_ref[...] = (jnp.dot(h2, w3_ref[...], preferred_element_type=jnp.float32)
                    + b3_ref[...])


def graph_classifier_forward(x, edge_index, params):
    """x: (N, 1) f32; edge_index: (2, E) int32.  Requires E == N (same
    implicit constraint as the original PyTorch module)."""
    N = x.shape[0]
    E = edge_index.shape[1]
    assert E == N, "original module semantics require E == N"
    assert x.shape[1] == input_dim == 1

    src = edge_index[0].astype(jnp.int32)
    dst = edge_index[1].astype(jnp.int32)

    # degree(edge_index[1]) -> per-edge-position weight (E == N)
    deg = jnp.zeros((N,), jnp.float32).at[dst].add(1.0)
    edge_weight = deg                                          # (E,)

    # Padded (lane-dense) sizes.
    NP = _round_up(max(N, LANE), LANE)
    EP = _round_up(max(E, LANE), LANE)
    HP = _round_up(hidden_dim, LANE)       # 64 -> 128
    CP = _round_up(num_classes, LANE)      # 2  -> 128

    # Only O(E) index/weight vectors go through HBM (never an N^2 matrix).
    src_p = jnp.full((EP, 1), -1, jnp.int32).at[:E, 0].set(src)
    dst_p = jnp.full((1, EP), -1, jnp.int32).at[0, :E].set(dst)
    ew_p = jnp.zeros((EP, 1), jnp.float32).at[:E, 0].set(edge_weight)
    x_p = jnp.zeros((NP, 1), jnp.float32).at[:N, :].set(x)

    w1, b1, w2, b2, w3, b3 = params
    H, C = hidden_dim, num_classes
    w1_p = jnp.zeros((1, HP), jnp.float32).at[:, :H].set(w1)
    b1_p = jnp.zeros((1, HP), jnp.float32).at[:, :H].set(b1)
    w2_p = jnp.zeros((HP, HP), jnp.float32).at[:H, :H].set(w2)
    b2_p = jnp.zeros((1, HP), jnp.float32).at[:, :H].set(b2)
    w3_p = jnp.zeros((HP, CP), jnp.float32).at[:H, :C].set(w3)
    b3_p = jnp.zeros((1, CP), jnp.float32).at[:, :C].set(b3)

    vmem_spec = pl.BlockSpec(memory_space=pltpu.MemorySpace.VMEM)

    flops = 2 * (NP * EP * NP          # adjacency build
                 + 2 * NP * NP * HP    # two aggregation matmuls
                 + NP * HP * HP        # layer-2 linear
                 + NP * HP * CP)       # final linear
    bytes_accessed = 4 * (3 * EP + NP            # src, dst, ew, x
                          + 2 * HP               # w1, b1
                          + HP * HP + HP         # w2, b2
                          + HP * CP + CP         # w3, b3
                          + NP * CP)             # output

    out_p = pl.pallas_call(
        graph_classifier_kernel,
        out_shape=jax.ShapeDtypeStruct((NP, CP), jnp.float32),
        in_specs=[vmem_spec] * 10,
        out_specs=vmem_spec,
        cost_estimate=pl.CostEstimate(flops=flops, transcendentals=0,
                                      bytes_accessed=bytes_accessed),
    )(src_p, dst_p, ew_p, x_p, w1_p, b1_p, w2_p, b2_p, w3_p, b3_p)

    return out_p[:N, :num_classes]


def init_linear(key, fan_in, fan_out):
    """PyTorch nn.Linear-style uniform init; weight stored as (in, out)."""
    kw, kb = jax.random.split(key)
    bound = 1.0 / jnp.sqrt(jnp.float32(fan_in))
    w = jax.random.uniform(kw, (fan_in, fan_out), jnp.float32, -bound, bound)
    b = jax.random.uniform(kb, (1, fan_out), jnp.float32, -bound, bound)
    return w, b


def reference_forward(x, edge_index, params):
    """Pure-JAX f32 reference of the exact PyTorch/PyG semantics."""
    w1, b1, w2, b2, w3, b3 = params
    N = x.shape[0]
    src, dst = edge_index[0], edge_index[1]
    deg = jnp.zeros((N,), jnp.float32).at[dst].add(1.0).reshape(-1, 1)

    def gcn(h, w, b):
        h = h @ w + b
        msg = h[src] * deg                      # (E,C) * (N,1), E == N
        return jnp.zeros((N, h.shape[1]), jnp.float32).at[dst].add(msg)

    h = gcn(x, w1, b1)
    h = gcn(h, w2, b2)
    return h @ w3 + b3


if __name__ == "__main__":
    key = jax.random.PRNGKey(0)
    k_x, k_e, k1, k2, k3 = jax.random.split(key, 5)

    N = 8   # num nodes
    E = 8   # num edges (must equal N, see module semantics note above)

    x = jax.random.normal(k_x, (N, input_dim), jnp.float32)
    src = jax.random.randint(k_e, (E,), 0, N, jnp.int32)
    dst = (src + 1) % N                         # simple ring-ish edges
    edge_index = jnp.stack([src, dst], axis=0)

    params = (*init_linear(k1, input_dim, hidden_dim),
              *init_linear(k2, hidden_dim, hidden_dim),
              *init_linear(k3, hidden_dim, num_classes))

    out = graph_classifier_forward(x, edge_index, params)
    out = jax.block_until_ready(out)

    ref = reference_forward(x, edge_index, params)
    assert out.shape == (N, num_classes)

    # bf16 operands on the aggregation matmuls (f32 accumulation) introduce
    # ~0.1-1% relative deviation vs the pure-f32 reference.
    rel_err = float(jnp.max(jnp.abs(out - ref)) / (jnp.max(jnp.abs(ref)) + 1e-8))
    assert rel_err < 2.5e-2, f"relative error too large: {rel_err}"

    print("KERNEL_OK")
</pallas_src>

<mosaic_0001>
module attributes {stable_mosaic.version = 11 : i64} {
  func.func @graph_classifier_kernel(%arg0: memref<128x1xi32, #tpu.memory_space<vmem>>, %arg1: memref<1x128xi32, #tpu.memory_space<vmem>>, %arg2: memref<128x1xf32, #tpu.memory_space<vmem>>, %arg3: memref<128x1xf32, #tpu.memory_space<vmem>>, %arg4: memref<1x128xf32, #tpu.memory_space<vmem>>, %arg5: memref<1x128xf32, #tpu.memory_space<vmem>>, %arg6: memref<128x128xf32, #tpu.memory_space<vmem>>, %arg7: memref<1x128xf32, #tpu.memory_space<vmem>>, %arg8: memref<128x128xf32, #tpu.memory_space<vmem>>, %arg9: memref<1x128xf32, #tpu.memory_space<vmem>>, %arg10: memref<128x128xf32, #tpu.memory_space<vmem>>) attributes {dimension_semantics = [], scalar_prefetch = 0 : i64, scratch_operands = 0 : i64, tpu.core_type = #tpu.core_type<tc>} {
    %c0 = arith.constant 0 : index
    %c0_0 = arith.constant 0 : index
    %0 = vector.load %arg0[%c0, %c0_0] : memref<128x1xi32, #tpu.memory_space<vmem>>, vector<128x1xi32>
    %c0_1 = arith.constant 0 : index
    %c0_2 = arith.constant 0 : index
    %1 = vector.load %arg1[%c0_1, %c0_2] : memref<1x128xi32, #tpu.memory_space<vmem>>, vector<1x128xi32>
    %c0_3 = arith.constant 0 : index
    %c0_4 = arith.constant 0 : index
    %2 = vector.load %arg2[%c0_3, %c0_4] : memref<128x1xf32, #tpu.memory_space<vmem>>, vector<128x1xf32>
    %3 = tpu.iota {dimensions = array<i32: 1>} : vector<128x128xi32>
    %4 = vector.broadcast %0 : vector<128x1xi32> to vector<128x128xi32>
    %5 = arith.cmpi eq, %4, %3 : vector<128x128xi32>
    %6 = arith.extui %5 : vector<128x128xi1> to vector<128x128xi32>
    %7 = arith.sitofp %6 : vector<128x128xi32> to vector<128x128xf32>
    %8 = arith.truncf %7 : vector<128x128xf32> to vector<128x128xbf16>
    %9 = arith.truncf %2 : vector<128x1xf32> to vector<128x1xbf16>
    %10 = vector.broadcast %9 : vector<128x1xbf16> to vector<128x128xbf16>
    %11 = arith.mulf %8, %10 : vector<128x128xbf16>
    %12 = tpu.iota {dimensions = array<i32: 0>} : vector<128x128xi32>
    %13 = vector.broadcast %1 : vector<1x128xi32> to vector<128x128xi32>
    %14 = arith.cmpi eq, %13, %12 : vector<128x128xi32>
    %15 = arith.extui %14 : vector<128x128xi1> to vector<128x128xi32>
    %16 = arith.sitofp %15 : vector<128x128xi32> to vector<128x128xf32>
    %17 = arith.truncf %16 : vector<128x128xf32> to vector<128x128xbf16>
    %cst = arith.constant dense<0.000000e+00> : vector<128x128xf32>
    %18 = tpu.matmul %17, %11, %cst {dimension_numbers = #tpu.dot_dimension_numbers<[1], [0], [0], [1], [0, 0, 1, 1], [], []>} : vector<128x128xbf16>, vector<128x128xbf16>, vector<128x128xf32> -> vector<128x128xf32>
    %19 = arith.truncf %18 : vector<128x128xf32> to vector<128x128xbf16>
    %c0_5 = arith.constant 0 : index
    %c0_6 = arith.constant 0 : index
    %20 = vector.load %arg3[%c0_5, %c0_6] : memref<128x1xf32, #tpu.memory_space<vmem>>, vector<128x1xf32>
    %c0_7 = arith.constant 0 : index
    %c0_8 = arith.constant 0 : index
    %21 = vector.load %arg4[%c0_7, %c0_8] : memref<1x128xf32, #tpu.memory_space<vmem>>, vector<1x128xf32>
    %22 = vector.broadcast %20 : vector<128x1xf32> to vector<128x128xf32>
    %23 = vector.broadcast %21 : vector<1x128xf32> to vector<128x128xf32>
    %24 = arith.mulf %22, %23 : vector<128x128xf32>
    %c0_9 = arith.constant 0 : index
    %c0_10 = arith.constant 0 : index
    %25 = vector.load %arg5[%c0_9, %c0_10] : memref<1x128xf32, #tpu.memory_space<vmem>>, vector<1x128xf32>
    %26 = vector.broadcast %25 : vector<1x128xf32> to vector<128x128xf32>
    %27 = arith.addf %24, %26 : vector<128x128xf32>
    %28 = arith.truncf %27 : vector<128x128xf32> to vector<128x128xbf16>
    %cst_11 = arith.constant dense<0.000000e+00> : vector<128x128xf32>
    %29 = tpu.matmul %19, %28, %cst_11 {dimension_numbers = #tpu.dot_dimension_numbers<[1], [0], [0], [1], [0, 0, 1, 1], [], []>} : vector<128x128xbf16>, vector<128x128xbf16>, vector<128x128xf32> -> vector<128x128xf32>
    %c0_12 = arith.constant 0 : index
    %c0_13 = arith.constant 0 : index
    %30 = vector.load %arg6[%c0_12, %c0_13] : memref<128x128xf32, #tpu.memory_space<vmem>>, vector<128x128xf32>
    %cst_14 = arith.constant dense<0.000000e+00> : vector<128x128xf32>
    %31 = tpu.matmul %29, %30, %cst_14 {dimension_numbers = #tpu.dot_dimension_numbers<[1], [0], [0], [1], [0, 0, 1, 1], [], []>} : vector<128x128xf32>, vector<128x128xf32>, vector<128x128xf32> -> vector<128x128xf32>
    %c0_15 = arith.constant 0 : index
    %c0_16 = arith.constant 0 : index
    %32 = vector.load %arg7[%c0_15, %c0_16] : memref<1x128xf32, #tpu.memory_space<vmem>>, vector<1x128xf32>
    %33 = vector.broadcast %32 : vector<1x128xf32> to vector<128x128xf32>
    %34 = arith.addf %31, %33 : vector<128x128xf32>
    %35 = arith.truncf %34 : vector<128x128xf32> to vector<128x128xbf16>
    %cst_17 = arith.constant dense<0.000000e+00> : vector<128x128xf32>
    %36 = tpu.matmul %19, %35, %cst_17 {dimension_numbers = #tpu.dot_dimension_numbers<[1], [0], [0], [1], [0, 0, 1, 1], [], []>} : vector<128x128xbf16>, vector<128x128xbf16>, vector<128x128xf32> -> vector<128x128xf32>
    %c0_18 = arith.constant 0 : index
    %c0_19 = arith.constant 0 : index
    %37 = vector.load %arg8[%c0_18, %c0_19] : memref<128x128xf32, #tpu.memory_space<vmem>>, vector<128x128xf32>
    %cst_20 = arith.constant dense<0.000000e+00> : vector<128x128xf32>
    %38 = tpu.matmul %36, %37, %cst_20 {dimension_numbers = #tpu.dot_dimension_numbers<[1], [0], [0], [1], [0, 0, 1, 1], [], []>} : vector<128x128xf32>, vector<128x128xf32>, vector<128x128xf32> -> vector<128x128xf32>
    %c0_21 = arith.constant 0 : index
    %c0_22 = arith.constant 0 : index
    %39 = vector.load %arg9[%c0_21, %c0_22] : memref<1x128xf32, #tpu.memory_space<vmem>>, vector<1x128xf32>
    %40 = vector.broadcast %39 : vector<1x128xf32> to vector<128x128xf32>
    %41 = arith.addf %38, %40 : vector<128x128xf32>
    %c0_23 = arith.constant 0 : index
    %c0_24 = arith.constant 0 : index
    %42 = vector.load %arg10[%c0_23, %c0_24] : memref<128x128xf32, #tpu.memory_space<vmem>>, vector<128x128xf32>
    tpu.vector_store %arg10[%c0_23, %c0_24], %41 {strides = array<i32>} : memref<128x128xf32, #tpu.memory_space<vmem>>, vector<128x128xf32>,
    return
  }
}

</mosaic_0001>

<llo_original>
// kernel: tpu_custom_call.1
$region0: #{tpu_custom_call.1}
  #allocation0 [shape = 'u32[]', space=smem, size = 0x4, offset = 0x4, fixed_abs, tag = 'smem constant byte address 0x4 - core index']
  #allocation1 [shape = 'u32[144,128]{1,0:T(1,128)}', space=vmem, size = 0x12000, scoped, tag = 'internal scratch']
  %s0 = inlined_call_operand.vmem [shape: s32[128,1], index: 0, kind: input, shape index: {}]
  %s1 = inlined_call_operand.vmem [shape: s32[1,128], index: 1, kind: input, shape index: {}]
  %s2 = inlined_call_operand.vmem [shape: f32[128,1], index: 2, kind: input, shape index: {}]
  %s3 = inlined_call_operand.vmem [shape: f32[128,1], index: 3, kind: input, shape index: {}]
  %s4 = inlined_call_operand.vmem [shape: f32[1,128], index: 4, kind: input, shape index: {}]
  %s5 = inlined_call_operand.vmem [shape: f32[1,128], index: 5, kind: input, shape index: {}]
  %s6 = inlined_call_operand.vmem [shape: f32[128,128], index: 6, kind: input, shape index: {}]
  %s7 = inlined_call_operand.vmem [shape: f32[1,128], index: 7, kind: input, shape index: {}]
  %s8 = inlined_call_operand.vmem [shape: f32[128,128], index: 8, kind: input, shape index: {}]
  %s9 = inlined_call_operand.vmem [shape: f32[1,128], index: 9, kind: input, shape index: {}]
  %s10 = inlined_call_operand.hbm [shape: f32[128,128], index: 10, kind: output, shape index: {}]
  %s11 = sld [smem:[#allocation0]]
  $region50: #{tpu_custom_call.1} parent=0
    _
  %s13 = ssub.s32 1, %s11
  %s14 = scalar_select 0, %s13, %s11
  $region1: #{tpu_custom_call.1} parent=0
    #allocation2 [shape = 'u8[65536]{0}', space=vmem, size = 0x10000, scoped, tag = 'output window, operand 0, single buffered']
    #allocation3 [shape = 's32[1]{0}', space=sflag, size = 0x4, scoped, tag = 'scoped memory for tpu_custom_call.1']
    %15 = vsyncpa [#allocation3], 0
    // Predicated region
    $region2: #{tpu_custom_call.1} parent=1 // pred_check
      _
    $region3: #{tpu_custom_call.1} parent=1 // pred_check_branch
      %17 = sbr.rel (0) target = $region5
    $region4: #{tpu_custom_call.1} parent=1 // pred_region
      _
    $region5: #{tpu_custom_call.1} parent=1 // pred_fallthru
      _
    // Predicated region
    $region6: #{tpu_custom_call.1} parent=1 // pred_check
      _
    $region7: #{tpu_custom_call.1} parent=1 // pred_check_branch
      %19 = sbr.rel (0) target = $region9
    $region8: #{tpu_custom_call.1} parent=1 // pred_region
      _
    $region9: #{tpu_custom_call.1} parent=1 // pred_fallthru
      _
    // Predicated region
    $region10: #{tpu_custom_call.1} parent=1 // pred_check
      _
    $region11: #{tpu_custom_call.1} parent=1 // pred_check_branch
      %21 = sbr.rel (0) target = $region13
    $region12: #{tpu_custom_call.1} parent=1 // pred_region
      _
    $region13: #{tpu_custom_call.1} parent=1 // pred_fallthru
      _
    // Predicated region
    $region14: #{tpu_custom_call.1} parent=1 // pred_check
      _
    $region15: #{tpu_custom_call.1} parent=1 // pred_check_branch
      %23 = sbr.rel (0) target = $region17
    $region16: #{tpu_custom_call.1} parent=1 // pred_region
      _
    $region17: #{tpu_custom_call.1} parent=1 // pred_fallthru
      _
    // Predicated region
    $region18: #{tpu_custom_call.1} parent=1 // pred_check
      _
    $region19: #{tpu_custom_call.1} parent=1 // pred_check_branch
      %25 = sbr.rel (0) target = $region21
    $region20: #{tpu_custom_call.1} parent=1 // pred_region
      _
    $region21: #{tpu_custom_call.1} parent=1 // pred_fallthru
      _
    // Predicated region
    $region22: #{tpu_custom_call.1} parent=1 // pred_check
      _
    $region23: #{tpu_custom_call.1} parent=1 // pred_check_branch
      %27 = sbr.rel (0) target = $region25
    $region24: #{tpu_custom_call.1} parent=1 // pred_region
      _
    $region25: #{tpu_custom_call.1} parent=1 // pred_fallthru
      _
    // Predicated region
    $region26: #{tpu_custom_call.1} parent=1 // pred_check
      _
    $region27: #{tpu_custom_call.1} parent=1 // pred_check_branch
      %29 = sbr.rel (0) target = $region29
    $region28: #{tpu_custom_call.1} parent=1 // pred_region
      _
    $region29: #{tpu_custom_call.1} parent=1 // pred_fallthru
      _
    // Predicated region
    $region30: #{tpu_custom_call.1} parent=1 // pred_check
      _
    $region31: #{tpu_custom_call.1} parent=1 // pred_check_branch
      %31 = sbr.rel (0) target = $region33
    $region32: #{tpu_custom_call.1} parent=1 // pred_region
      _
    $region33: #{tpu_custom_call.1} parent=1 // pred_fallthru
      _
    // Predicated region
    $region34: #{tpu_custom_call.1} parent=1 // pred_check
      _
    $region35: #{tpu_custom_call.1} parent=1 // pred_check_branch
      %33 = sbr.rel (0) target = $region37
    $region36: #{tpu_custom_call.1} parent=1 // pred_region
      _
    $region37: #{tpu_custom_call.1} parent=1 // pred_fallthru
      _
    // Predicated region
    $region38: #{tpu_custom_call.1} parent=1 // pred_check
      _
    $region39: #{tpu_custom_call.1} parent=1 // pred_check_branch
      %35 = sbr.rel (0) target = $region41
    $region40: #{tpu_custom_call.1} parent=1 // pred_region
      _
    $region41: #{tpu_custom_call.1} parent=1 // pred_fallthru
      _
    %v37 = vld [vmem:[%s0] sm:$0xff]
    %v38 = vld [vmem:[%s0 + $0x8] sm:$0xff]
    %v39 = vld [vmem:[%s0 + $0x10] sm:$0xff]
    %v40 = vld [vmem:[%s0 + $0x18] sm:$0xff]
    %v41 = vld [vmem:[%s0 + $0x20] sm:$0xff]
    %v42 = vld [vmem:[%s0 + $0x28] sm:$0xff]
    %v43 = vld [vmem:[%s0 + $0x30] sm:$0xff]
    %v44 = vld [vmem:[%s0 + $0x38] sm:$0xff]
    %v45 = vld [vmem:[%s0 + $0x40] sm:$0xff]
    %v46 = vld [vmem:[%s0 + $0x48] sm:$0xff]
    %v47 = vld [vmem:[%s0 + $0x50] sm:$0xff]
    %v48 = vld [vmem:[%s0 + $0x58] sm:$0xff]
    %v49 = vld [vmem:[%s0 + $0x60] sm:$0xff]
    %v50 = vld [vmem:[%s0 + $0x68] sm:$0xff]
    %v51 = vld [vmem:[%s0 + $0x70] sm:$0xff]
    %v52 = vld [vmem:[%s0 + $0x78] sm:$0xff]
    %v53 = vld [vmem:[%s1] sm:$0x1]
    %v54 = vld [vmem:[%s2] sm:$0xff]
    %v55 = vld [vmem:[%s2 + $0x8] sm:$0xff]
    %v56 = vld [vmem:[%s2 + $0x10] sm:$0xff]
    %v57 = vld [vmem:[%s2 + $0x18] sm:$0xff]
    %v58 = vld [vmem:[%s2 + $0x20] sm:$0xff]
    %v59 = vld [vmem:[%s2 + $0x28] sm:$0xff]
    %v60 = vld [vmem:[%s2 + $0x30] sm:$0xff]
    %v61 = vld [vmem:[%s2 + $0x38] sm:$0xff]
    %v62 = vld [vmem:[%s2 + $0x40] sm:$0xff]
    %v63 = vld [vmem:[%s2 + $0x48] sm:$0xff]
    %v64 = vld [vmem:[%s2 + $0x50] sm:$0xff]
    %v65 = vld [vmem:[%s2 + $0x58] sm:$0xff]
    %v66 = vld [vmem:[%s2 + $0x60] sm:$0xff]
    %v67 = vld [vmem:[%s2 + $0x68] sm:$0xff]
    %v68 = vld [vmem:[%s2 + $0x70] sm:$0xff]
    %v69 = vld [vmem:[%s2 + $0x78] sm:$0xff]
    %v70 = vlaneseq
    %v71 = vand.u32 %v70, 127
    %72 = vset.pattern.permute.xlu0 0
    %73 = vperm.xlu0 %72, %v37
    %v74 = vpop.permute.xlu0 %73
    %75 = vset.pattern.permute.xlu0 0
    %76 = vperm.xlu0 %75, %v38
    %v77 = vpop.permute.xlu0 %76
    %78 = vset.pattern.permute.xlu0 0
    %79 = vperm.xlu0 %78, %v39
    %v80 = vpop.permute.xlu0 %79
    %81 = vset.pattern.permute.xlu0 0
    %82 = vperm.xlu0 %81, %v40
    %v83 = vpop.permute.xlu0 %82
    %84 = vset.pattern.permute.xlu0 0
    %85 = vperm.xlu0 %84, %v41
    %v86 = vpop.permute.xlu0 %85
    %87 = vset.pattern.permute.xlu0 0
    %88 = vperm.xlu0 %87, %v42
    %v89 = vpop.permute.xlu0 %88
    %90 = vset.pattern.permute.xlu0 0
    %91 = vperm.xlu0 %90, %v43
    %v92 = vpop.permute.xlu0 %91
    %93 = vset.pattern.permute.xlu0 0
    %94 = vperm.xlu0 %93, %v44
    %v95 = vpop.permute.xlu0 %94
    %96 = vset.pattern.permute.xlu0 0
    %97 = vperm.xlu0 %96, %v45
    %v98 = vpop.permute.xlu0 %97
    %99 = vset.pattern.permute.xlu0 0
    %100 = vperm.xlu0 %99, %v46
    %v101 = vpop.permute.xlu0 %100
    %102 = vset.pattern.permute.xlu0 0
    %103 = vperm.xlu0 %102, %v47
    %v104 = vpop.permute.xlu0 %103
    %105 = vset.pattern.permute.xlu0 0
    %106 = vperm.xlu0 %105, %v48
    %v107 = vpop.permute.xlu0 %106
    %108 = vset.pattern.permute.xlu0 0
    %109 = vperm.xlu0 %108, %v49
    %v110 = vpop.permute.xlu0 %109
    %111 = vset.pattern.permute.xlu0 0
    %112 = vperm.xlu0 %111, %v50
    %v113 = vpop.permute.xlu0 %112
    %114 = vset.pattern.permute.xlu0 0
    %115 = vperm.xlu0 %114, %v51
    %v116 = vpop.permute.xlu0 %115
    %117 = vset.pattern.permute.xlu0 0
    %118 = vperm.xlu0 %117, %v52
    %v119 = vpop.permute.xlu0 %118
    %vm120 = vcmp.eq.s32.totalorder %v74, %v71
    %vm121 = vcmp.eq.s32.totalorder %v77, %v71
    %vm122 = vcmp.eq.s32.totalorder %v80, %v71
    %vm123 = vcmp.eq.s32.totalorder %v83, %v71
    %vm124 = vcmp.eq.s32.totalorder %v86, %v71
    %vm125 = vcmp.eq.s32.totalorder %v89, %v71
    %vm126 = vcmp.eq.s32.totalorder %v92, %v71
    %vm127 = vcmp.eq.s32.totalorder %v95, %v71
    %vm128 = vcmp.eq.s32.totalorder %v98, %v71
    %vm129 = vcmp.eq.s32.totalorder %v101, %v71
    %vm130 = vcmp.eq.s32.totalorder %v104, %v71
    %vm131 = vcmp.eq.s32.totalorder %v107, %v71
    %vm132 = vcmp.eq.s32.totalorder %v110, %v71
    %vm133 = vcmp.eq.s32.totalorder %v113, %v71
    %vm134 = vcmp.eq.s32.totalorder %v116, %v71
    %vm135 = vcmp.eq.s32.totalorder %v119, %v71
    %v136 = vsel %vm120, 1, 0
    %v137 = vsel %vm121, 1, 0
    %v138 = vsel %vm122, 1, 0
    %v139 = vsel %vm123, 1, 0
    %v140 = vsel %vm124, 1, 0
    %v141 = vsel %vm125, 1, 0
    %v142 = vsel %vm126, 1, 0
    %v143 = vsel %vm127, 1, 0
    %v144 = vsel %vm128, 1, 0
    %v145 = vsel %vm129, 1, 0
    %v146 = vsel %vm130, 1, 0
    %v147 = vsel %vm131, 1, 0
    %v148 = vsel %vm132, 1, 0
    %v149 = vsel %vm133, 1, 0
    %v150 = vsel %vm134, 1, 0
    %v151 = vsel %vm135, 1, 0
    %v152 = vcvt.s32.f32 %v136
    %v153 = vcvt.s32.f32 %v137
    %v154 = vcvt.s32.f32 %v138
    %v155 = vcvt.s32.f32 %v139
    %v156 = vcvt.s32.f32 %v140
    %v157 = vcvt.s32.f32 %v141
    %v158 = vcvt.s32.f32 %v142
    %v159 = vcvt.s32.f32 %v143
    %v160 = vcvt.s32.f32 %v144
    %v161 = vcvt.s32.f32 %v145
    %v162 = vcvt.s32.f32 %v146
    %v163 = vcvt.s32.f32 %v147
    %v164 = vcvt.s32.f32 %v148
    %v165 = vcvt.s32.f32 %v149
    %v166 = vcvt.s32.f32 %v150
    %v167 = vcvt.s32.f32 %v151
    %v168 = vpack.c.bf16 %v153, %v152
    %v169 = vpack.c.bf16 %v155, %v154
    %v170 = vpack.c.bf16 %v157, %v156
    %v171 = vpack.c.bf16 %v159, %v158
    %v172 = vpack.c.bf16 %v161, %v160
    %v173 = vpack.c.bf16 %v163, %v162
    %v174 = vpack.c.bf16 %v165, %v164
    %v175 = vpack.c.bf16 %v167, %v166
    %v176 = vpack.c.bf16 %v55, %v54
    %v177 = vpack.c.bf16 %v57, %v56
    %v178 = vpack.c.bf16 %v59, %v58
    %v179 = vpack.c.bf16 %v61, %v60
    %v180 = vpack.c.bf16 %v63, %v62
    %v181 = vpack.c.bf16 %v65, %v64
    %v182 = vpack.c.bf16 %v67, %v66
    %v183 = vpack.c.bf16 %v69, %v68
    %185 = vset.pattern.permute.xlu0 0
    %186 = vperm.xlu0 %185, %v176
    %v187 = vpop.permute.xlu0 %186
    %190 = vset.pattern.permute.xlu0 0
    %191 = vperm.xlu0 %190, %v177
    %v192 = vpop.permute.xlu0 %191
    %195 = vset.pattern.permute.xlu0 0
    %196 = vperm.xlu0 %195, %v178
    %v197 = vpop.permute.xlu0 %196
    %200 = vset.pattern.permute.xlu0 0
    %201 = vperm.xlu0 %200, %v179
    %v202 = vpop.permute.xlu0 %201
    %205 = vset.pattern.permute.xlu0 0
    %206 = vperm.xlu0 %205, %v180
    %v207 = vpop.permute.xlu0 %206
    %210 = vset.pattern.permute.xlu0 0
    %211 = vperm.xlu0 %210, %v181
    %v212 = vpop.permute.xlu0 %211
    %215 = vset.pattern.permute.xlu0 0
    %216 = vperm.xlu0 %215, %v182
    %v217 = vpop.permute.xlu0 %216
    %220 = vset.pattern.permute.xlu0 0
    %221 = vperm.xlu0 %220, %v183
    %v222 = vpop.permute.xlu0 %221
    %v224 = vmul.bf16 %v168, %v187
    %v225 = vmul.bf16 %v169, %v192
    %v226 = vmul.bf16 %v170, %v197
    %v227 = vmul.bf16 %v171, %v202
    %v228 = vmul.bf16 %v172, %v207
    %v229 = vmul.bf16 %v173, %v212
    %v230 = vmul.bf16 %v174, %v217
    %v231 = vmul.bf16 %v175, %v222
    %v232 = vlaneseq
    %v233 = vshrl.u32 %v232, 7
    %v234 = vadd.s32 %v233, 8
    %v235 = vadd.s32 %v233, 16
    %v236 = vadd.s32 %v233, 24
    %v237 = vadd.s32 %v233, 32
    %v238 = vadd.s32 %v233, 40
    %v239 = vadd.s32 %v233, 48
    %v240 = vadd.s32 %v233, 56
    %v241 = vadd.s32 %v233, 64
    %v242 = vadd.s32 %v233, 72
    %v243 = vadd.s32 %v233, 80
    %v244 = vadd.s32 %v233, 88
    %v245 = vadd.s32 %v233, 96
    %v246 = vadd.s32 %v233, 104
    %v247 = vadd.s32 %v233, 112
    %v248 = vadd.s32 %v233, 120
    %v249 = vlaneseq
    %v250 = vshrl.u32 %v249, 7
    %v251 = vsub.s32 0, %v250
    %v252 = vrot.slane %v53, %v251
    %vm253 = vcmp.eq.s32.totalorder %v252, %v233
    %vm254 = vcmp.eq.s32.totalorder %v252, %v234
    %vm255 = vcmp.eq.s32.totalorder %v252, %v235
    %vm256 = vcmp.eq.s32.totalorder %v252, %v236
    %vm257 = vcmp.eq.s32.totalorder %v252, %v237
    %vm258 = vcmp.eq.s32.totalorder %v252, %v238
    %vm259 = vcmp.eq.s32.totalorder %v252, %v239
    %vm260 = vcmp.eq.s32.totalorder %v252, %v240
    %vm261 = vcmp.eq.s32.totalorder %v252, %v241
    %vm262 = vcmp.eq.s32.totalorder %v252, %v242
    %vm263 = vcmp.eq.s32.totalorder %v252, %v243
    %vm264 = vcmp.eq.s32.totalorder %v252, %v244
    %vm265 = vcmp.eq.s32.totalorder %v252, %v245
    %vm266 = vcmp.eq.s32.totalorder %v252, %v246
    %vm267 = vcmp.eq.s32.totalorder %v252, %v247
    %vm268 = vcmp.eq.s32.totalorder %v252, %v248
    %v269 = vsel %vm253, 1, 0
    %v270 = vsel %vm254, 1, 0
    %v271 = vsel %vm255, 1, 0
    %v272 = vsel %vm256, 1, 0
    %v273 = vsel %vm257, 1, 0
    %v274 = vsel %vm258, 1, 0
    %v275 = vsel %vm259, 1, 0
    %v276 = vsel %vm260, 1, 0
    %v277 = vsel %vm261, 1, 0
    %v278 = vsel %vm262, 1, 0
    %v279 = vsel %vm263, 1, 0
    %v280 = vsel %vm264, 1, 0
    %v281 = vsel %vm265, 1, 0
    %v282 = vsel %vm266, 1, 0
    %v283 = vsel %vm267, 1, 0
    %v284 = vsel %vm268, 1, 0
    %v285 = vcvt.s32.f32 %v269
    %v286 = vcvt.s32.f32 %v270
    %v287 = vcvt.s32.f32 %v271
    %v288 = vcvt.s32.f32 %v272
    %v289 = vcvt.s32.f32 %v273
    %v290 = vcvt.s32.f32 %v274
    %v291 = vcvt.s32.f32 %v275
    %v292 = vcvt.s32.f32 %v276
    %v293 = vcvt.s32.f32 %v277
    %v294 = vcvt.s32.f32 %v278
    %v295 = vcvt.s32.f32 %v279
    %v296 = vcvt.s32.f32 %v280
    %v297 = vcvt.s32.f32 %v281
    %v298 = vcvt.s32.f32 %v282
    %v299 = vcvt.s32.f32 %v283
    %v300 = vcvt.s32.f32 %v284
    %v301 = vpack.c.bf16 %v286, %v285
    %v302 = vpack.c.bf16 %v288, %v287
    %v303 = vpack.c.bf16 %v290, %v289
    %v304 = vpack.c.bf16 %v292, %v291
    %v305 = vpack.c.bf16 %v294, %v293
    %v306 = vpack.c.bf16 %v296, %v295
    %v307 = vpack.c.bf16 %v298, %v297
    %v308 = vpack.c.bf16 %v300, %v299
    %309 = vmatprep.subr.bf16.mxu0 0
    %310 = vmatpush1.bf16.msra.mxu0 %v231
    %311 = vmatprep.subr.bf16.mxu0 0
    %312 = vmatpush1.bf16.msra.mxu0 %v230
    %313 = vmatprep.subr.bf16.mxu0 0
    %314 = vmatpush1.bf16.msra.mxu0 %v229
    %315 = vmatprep.subr.bf16.mxu0 0
    %316 = vmatpush1.bf16.msra.mxu0 %v228
    %317 = vmatprep.subr.bf16.mxu0 0
    %318 = vmatpush1.bf16.msra.mxu0 %v227
    %319 = vmatprep.subr.bf16.mxu0 0
    %320 = vmatpush1.bf16.msra.mxu0 %v226
    %321 = vmatprep.subr.bf16.mxu0 0
    %322 = vmatpush1.bf16.msra.mxu0 %v225
    %323 = vmatprep.subr.bf16.mxu0 0
    %324 = vmatpush1.bf16.msra.mxu0 %v224
    %325 = vmatprep.subr.bf16.mxu0 0
    %326 = vmatpush2.bf16.msra.mxu0 0
    %327 = vmatprep.subr.bf16.mxu0 0
    %328 = vmatpush2.bf16.msra.mxu0 0
    %329 = vmatprep.subr.bf16.mxu0 0
    %330 = vmatpush2.bf16.msra.mxu0 0
    %331 = vmatprep.subr.bf16.mxu0 0
    %332 = vmatpush2.bf16.msra.mxu0 0
    %333 = vmatprep.subr.bf16.mxu0 0
    %334 = vmatpush2.bf16.msra.mxu0 0
    %335 = vmatprep.subr.bf16.mxu0 0
    %336 = vmatpush2.bf16.msra.mxu0 0
    %337 = vmatprep.subr.bf16.mxu0 0
    %338 = vmatpush2.bf16.msra.mxu0 0
    %339 = vmatprep.subr.bf16.mxu0 0
    %340 = vmatpush2.bf16.msra.mxu0 0
    %341 = vmatprep.mubr.bf16.mxu0 0
    %342 = vmatmul.mubr.bf16.gmra.mxu0 %v301
    %v343 = vpop.f32.mrf.mxu0
    %v344 = vadd.f32 0.0, %v343
    %v345 = vpop.f32.mrf.mxu0
    %v346 = vpop.f32.mrf.mxu0
    %v347 = vadd.f32 0.0, %v346
    %v348 = vpop.f32.mrf.mxu0
    %349 = vmatprep.mubr.bf16.mxu0 0
    %350 = vmatmul.mubr.bf16.gmra.mxu0 %v302
    %v351 = vpop.f32.mrf.mxu0
    %v352 = vadd.f32 0.0, %v351
    %v353 = vpop.f32.mrf.mxu0
    %v354 = vpop.f32.mrf.mxu0
    %v355 = vadd.f32 0.0, %v354
    %v356 = vpop.f32.mrf.mxu0
    %357 = vmatprep.mubr.bf16.mxu0 0
    %358 = vmatmul.mubr.bf16.gmra.mxu0 %v303
    %v359 = vpop.f32.mrf.mxu0
    %v360 = vadd.f32 0.0, %v359
    %v361 = vpop.f32.mrf.mxu0
    %v362 = vpop.f32.mrf.mxu0
    %v363 = vadd.f32 0.0, %v362
    %v364 = vpop.f32.mrf.mxu0
    %365 = vmatprep.mubr.bf16.mxu0 0
    %366 = vmatmul.mubr.bf16.gmra.mxu0 %v304
    %v367 = vpop.f32.mrf.mxu0
    %v368 = vadd.f32 0.0, %v367
    %v369 = vpop.f32.mrf.mxu0
    %v370 = vpop.f32.mrf.mxu0
    %v371 = vadd.f32 0.0, %v370
    %v372 = vpop.f32.mrf.mxu0
    %373 = vmatprep.mubr.bf16.mxu0 0
    %374 = vmatmul.mubr.bf16.gmra.mxu0 %v305
    %v375 = vpop.f32.mrf.mxu0
    %v376 = vadd.f32 0.0, %v375
    %v377 = vpop.f32.mrf.mxu0
    %v378 = vpop.f32.mrf.mxu0
    %v379 = vadd.f32 0.0, %v378
    %v380 = vpop.f32.mrf.mxu0
    %381 = vmatprep.mubr.bf16.mxu0 0
    %382 = vmatmul.mubr.bf16.gmra.mxu0 %v306
    %v383 = vpop.f32.mrf.mxu0
    %v384 = vadd.f32 0.0, %v383
    %v385 = vpop.f32.mrf.mxu0
    %v386 = vpop.f32.mrf.mxu0
    %v387 = vadd.f32 0.0, %v386
    %v388 = vpop.f32.mrf.mxu0
    %389 = vmatprep.mubr.bf16.mxu0 0
    %390 = vmatmul.mubr.bf16.gmra.mxu0 %v307
    %v391 = vpop.f32.mrf.mxu0
    %v392 = vadd.f32 0.0, %v391
    %v393 = vpop.f32.mrf.mxu0
    %v394 = vpop.f32.mrf.mxu0
    %v395 = vadd.f32 0.0, %v394
    %v396 = vpop.f32.mrf.mxu0
    %397 = vmatprep.mubr.bf16.mxu0 0
    %398 = vmatmul.mubr.bf16.gmra.mxu0 %v308
    %v399 = vpop.f32.mrf.mxu0
    %v400 = vadd.f32 0.0, %v399
    %v401 = vpop.f32.mrf.mxu0
    %v402 = vpop.f32.mrf.mxu0
    %v403 = vadd.f32 0.0, %v402
    %v404 = vpop.f32.mrf.mxu0
    %405 = vdwg.mxu0
    %v406 = vpack.c.bf16 %v347, %v344
    %v407 = vpack.c.bf16 %v355, %v352
    %v408 = vpack.c.bf16 %v363, %v360
    %v409 = vpack.c.bf16 %v371, %v368
    %v410 = vpack.c.bf16 %v379, %v376
    %v411 = vpack.c.bf16 %v387, %v384
    %v412 = vpack.c.bf16 %v395, %v392
    %v413 = vpack.c.bf16 %v403, %v400
    %v414 = vld [vmem:[%s3] sm:$0xff]
    %v415 = vld [vmem:[%s3 + $0x8] sm:$0xff]
    %v416 = vld [vmem:[%s3 + $0x10] sm:$0xff]
    %v417 = vld [vmem:[%s3 + $0x18] sm:$0xff]
    %v418 = vld [vmem:[%s3 + $0x20] sm:$0xff]
    %v419 = vld [vmem:[%s3 + $0x28] sm:$0xff]
    %v420 = vld [vmem:[%s3 + $0x30] sm:$0xff]
    %v421 = vld [vmem:[%s3 + $0x38] sm:$0xff]
    %v422 = vld [vmem:[%s3 + $0x40] sm:$0xff]
    %v423 = vld [vmem:[%s3 + $0x48] sm:$0xff]
    %v424 = vld [vmem:[%s3 + $0x50] sm:$0xff]
    %v425 = vld [vmem:[%s3 + $0x58] sm:$0xff]
    %v426 = vld [vmem:[%s3 + $0x60] sm:$0xff]
    %v427 = vld [vmem:[%s3 + $0x68] sm:$0xff]
    %v428 = vld [vmem:[%s3 + $0x70] sm:$0xff]
    %v429 = vld [vmem:[%s3 + $0x78] sm:$0xff]
    %v430 = vld [vmem:[%s4] sm:$0x1]
    %432 = vset.pattern.permute.xlu0 0
    %433 = vperm.xlu0 %432, %v414
    %v434 = vpop.permute.xlu0 %433
    %437 = vset.pattern.permute.xlu0 0
    %438 = vperm.xlu0 %437, %v415
    %v439 = vpop.permute.xlu0 %438
    %442 = vset.pattern.permute.xlu0 0
    %443 = vperm.xlu0 %442, %v416
    %v444 = vpop.permute.xlu0 %443
    %447 = vset.pattern.permute.xlu0 0
    %448 = vperm.xlu0 %447, %v417
    %v449 = vpop.permute.xlu0 %448
    %452 = vset.pattern.permute.xlu0 0
    %453 = vperm.xlu0 %452, %v418
    %v454 = vpop.permute.xlu0 %453
    %457 = vset.pattern.permute.xlu0 0
    %458 = vperm.xlu0 %457, %v419
    %v459 = vpop.permute.xlu0 %458
    %462 = vset.pattern.permute.xlu0 0
    %463 = vperm.xlu0 %462, %v420
    %v464 = vpop.permute.xlu0 %463
    %467 = vset.pattern.permute.xlu0 0
    %468 = vperm.xlu0 %467, %v421
    %v469 = vpop.permute.xlu0 %468
    %472 = vset.pattern.permute.xlu0 0
    %473 = vperm.xlu0 %472, %v422
    %v474 = vpop.permute.xlu0 %473
    %477 = vset.pattern.permute.xlu0 0
    %478 = vperm.xlu0 %477, %v423
    %v479 = vpop.permute.xlu0 %478
    %482 = vset.pattern.permute.xlu0 0
    %483 = vperm.xlu0 %482, %v424
    %v484 = vpop.permute.xlu0 %483
    %487 = vset.pattern.permute.xlu0 0
    %488 = vperm.xlu0 %487, %v425
    %v489 = vpop.permute.xlu0 %488
    %492 = vset.pattern.permute.xlu0 0
    %493 = vperm.xlu0 %492, %v426
    %v494 = vpop.permute.xlu0 %493
    %497 = vset.pattern.permute.xlu0 0
    %498 = vperm.xlu0 %497, %v427
    %v499 = vpop.permute.xlu0 %498
    %502 = vset.pattern.permute.xlu0 0
    %503 = vperm.xlu0 %502, %v428
    %v504 = vpop.permute.xlu0 %503
    %507 = vset.pattern.permute.xlu0 0
    %508 = vperm.xlu0 %507, %v429
    %v509 = vpop.permute.xlu0 %508
    %v512 = vlaneseq
    %v513 = vshrl.u32 %v512, 7
    %v514 = vsub.s32 0, %v513
    %v515 = vrot.slane %v430, %v514
    %v517 = vmul.f32 %v434, %v515
    %v518 = vmul.f32 %v439, %v515
    %v519 = vmul.f32 %v444, %v515
    %v520 = vmul.f32 %v449, %v515
    %v521 = vmul.f32 %v454, %v515
    %v522 = vmul.f32 %v459, %v515
    %v523 = vmul.f32 %v464, %v515
    %v524 = vmul.f32 %v469, %v515
    %v525 = vmul.f32 %v474, %v515
    %v526 = vmul.f32 %v479, %v515
    %v527 = vmul.f32 %v484, %v515
    %v528 = vmul.f32 %v489, %v515
    %v529 = vmul.f32 %v494, %v515
    %v530 = vmul.f32 %v499, %v515
    %v531 = vmul.f32 %v504, %v515
    %v532 = vmul.f32 %v509, %v515
    %v533 = vld [vmem:[%s5] sm:$0x1]
    %v535 = vlaneseq
    %v536 = vshrl.u32 %v535, 7
    %v537 = vsub.s32 0, %v536
    %v538 = vrot.slane %v533, %v537
    %v540 = vadd.f32 %v517, %v538
    %v541 = vadd.f32 %v518, %v538
    %v542 = vadd.f32 %v519, %v538
    %v543 = vadd.f32 %v520, %v538
    %v544 = vadd.f32 %v521, %v538
    %v545 = vadd.f32 %v522, %v538
    %v546 = vadd.f32 %v523, %v538
    %v547 = vadd.f32 %v524, %v538
    %v548 = vadd.f32 %v525, %v538
    %v549 = vadd.f32 %v526, %v538
    %v550 = vadd.f32 %v527, %v538
    %v551 = vadd.f32 %v528, %v538
    %v552 = vadd.f32 %v529, %v538
    %v553 = vadd.f32 %v530, %v538
    %v554 = vadd.f32 %v531, %v538
    %v555 = vadd.f32 %v532, %v538
    %v556 = vpack.c.bf16 %v541, %v540
    %v557 = vpack.c.bf16 %v543, %v542
    %v558 = vpack.c.bf16 %v545, %v544
    %v559 = vpack.c.bf16 %v547, %v546
    %v560 = vpack.c.bf16 %v549, %v548
    %v561 = vpack.c.bf16 %v551, %v550
    %v562 = vpack.c.bf16 %v553, %v552
    %v563 = vpack.c.bf16 %v555, %v554
    %564 = vmatprep.subr.bf16.mxu0 0
    %565 = vmatpush1.bf16.msra.mxu0 %v563
    %566 = vmatprep.subr.bf16.mxu0 0
    %567 = vmatpush1.bf16.msra.mxu0 %v562
    %568 = vmatprep.subr.bf16.mxu0 0
    %569 = vmatpush1.bf16.msra.mxu0 %v561
    %570 = vmatprep.subr.bf16.mxu0 0
    %571 = vmatpush1.bf16.msra.mxu0 %v560
    %572 = vmatprep.subr.bf16.mxu0 0
    %573 = vmatpush1.bf16.msra.mxu0 %v559
    %574 = vmatprep.subr.bf16.mxu0 0
    %575 = vmatpush1.bf16.msra.mxu0 %v558
    %576 = vmatprep.subr.bf16.mxu0 0
    %577 = vmatpush1.bf16.msra.mxu0 %v557
    %578 = vmatprep.subr.bf16.mxu0 0
    %579 = vmatpush1.bf16.msra.mxu0 %v556
    %580 = vmatprep.subr.bf16.mxu0 0
    %581 = vmatpush2.bf16.msra.mxu0 0
    %582 = vmatprep.subr.bf16.mxu0 0
    %583 = vmatpush2.bf16.msra.mxu0 0
    %584 = vmatprep.subr.bf16.mxu0 0
    %585 = vmatpush2.bf16.msra.mxu0 0
    %586 = vmatprep.subr.bf16.mxu0 0
    %587 = vmatpush2.bf16.msra.mxu0 0
    %588 = vmatprep.subr.bf16.mxu0 0
    %589 = vmatpush2.bf16.msra.mxu0 0
    %590 = vmatprep.subr.bf16.mxu0 0
    %591 = vmatpush2.bf16.msra.mxu0 0
    %592 = vmatprep.subr.bf16.mxu0 0
    %593 = vmatpush2.bf16.msra.mxu0 0
    %594 = vmatprep.subr.bf16.mxu0 0
    %595 = vmatpush2.bf16.msra.mxu0 0
    %596 = vmatprep.mubr.bf16.mxu0 0
    %597 = vmatmul.mubr.bf16.gmra.mxu0 %v406
    %v598 = vpop.f32.mrf.mxu0
    %v599 = vadd.f32 0.0, %v598
    %v600 = vpop.f32.mrf.mxu0
    %v601 = vpop.f32.mrf.mxu0
    %v602 = vadd.f32 0.0, %v601
    %v603 = vpop.f32.mrf.mxu0
    %604 = vmatprep.mubr.bf16.mxu0 0
    %605 = vmatmul.mubr.bf16.gmra.mxu0 %v407
    %v606 = vpop.f32.mrf.mxu0
    %v607 = vadd.f32 0.0, %v606
    %v608 = vpop.f32.mrf.mxu0
    %v609 = vpop.f32.mrf.mxu0
    %v610 = vadd.f32 0.0, %v609
    %v611 = vpop.f32.mrf.mxu0
    %612 = vmatprep.mubr.bf16.mxu0 0
    %613 = vmatmul.mubr.bf16.gmra.mxu0 %v408
    %v614 = vpop.f32.mrf.mxu0
    %v615 = vadd.f32 0.0, %v614
    %v616 = vpop.f32.mrf.mxu0
    %v617 = vpop.f32.mrf.mxu0
    %v618 = vadd.f32 0.0, %v617
    %v619 = vpop.f32.mrf.mxu0
    %620 = vmatprep.mubr.bf16.mxu0 0
    %621 = vmatmul.mubr.bf16.gmra.mxu0 %v409
    %v622 = vpop.f32.mrf.mxu0
    %v623 = vadd.f32 0.0, %v622
    %v624 = vpop.f32.mrf.mxu0
    %v625 = vpop.f32.mrf.mxu0
    %v626 = vadd.f32 0.0, %v625
    %v627 = vpop.f32.mrf.mxu0
    %628 = vmatprep.mubr.bf16.mxu0 0
    %629 = vmatmul.mubr.bf16.gmra.mxu0 %v410
    %v630 = vpop.f32.mrf.mxu0
    %v631 = vadd.f32 0.0, %v630
    %v632 = vpop.f32.mrf.mxu0
    %v633 = vpop.f32.mrf.mxu0
    %v634 = vadd.f32 0.0, %v633
    %v635 = vpop.f32.mrf.mxu0
    %636 = vmatprep.mubr.bf16.mxu0 0
    %637 = vmatmul.mubr.bf16.gmra.mxu0 %v411
    %v638 = vpop.f32.mrf.mxu0
    %v639 = vadd.f32 0.0, %v638
    %v640 = vpop.f32.mrf.mxu0
    %v641 = vpop.f32.mrf.mxu0
    %v642 = vadd.f32 0.0, %v641
    %v643 = vpop.f32.mrf.mxu0
    %644 = vmatprep.mubr.bf16.mxu0 0
    %645 = vmatmul.mubr.bf16.gmra.mxu0 %v412
    %v646 = vpop.f32.mrf.mxu0
    %v647 = vadd.f32 0.0, %v646
    %v648 = vpop.f32.mrf.mxu0
    %v649 = vpop.f32.mrf.mxu0
    %v650 = vadd.f32 0.0, %v649
    %v651 = vpop.f32.mrf.mxu0
    %652 = vmatprep.mubr.bf16.mxu0 0
    %653 = vmatmul.mubr.bf16.gmra.mxu0 %v413
    %v654 = vpop.f32.mrf.mxu0
    %v655 = vadd.f32 0.0, %v654
    %v656 = vpop.f32.mrf.mxu0
    %v657 = vpop.f32.mrf.mxu0
    %v658 = vadd.f32 0.0, %v657
    %v659 = vpop.f32.mrf.mxu0
    %660 = vdwg.mxu0
    %v661 = vld [vmem:[%s6] sm:$0xff]
    %v662 = vld [vmem:[%s6 + $0x8] sm:$0xff]
    %v663 = vld [vmem:[%s6 + $0x10] sm:$0xff]
    %v664 = vld [vmem:[%s6 + $0x18] sm:$0xff]
    %v665 = vld [vmem:[%s6 + $0x20] sm:$0xff]
    %v666 = vld [vmem:[%s6 + $0x28] sm:$0xff]
    %v667 = vld [vmem:[%s6 + $0x30] sm:$0xff]
    %v668 = vld [vmem:[%s6 + $0x38] sm:$0xff]
    %v669 = vld [vmem:[%s6 + $0x40] sm:$0xff]
    %v670 = vld [vmem:[%s6 + $0x48] sm:$0xff]
    %v671 = vld [vmem:[%s6 + $0x50] sm:$0xff]
    %v672 = vld [vmem:[%s6 + $0x58] sm:$0xff]
    %v673 = vld [vmem:[%s6 + $0x60] sm:$0xff]
    %v674 = vld [vmem:[%s6 + $0x68] sm:$0xff]
    %v675 = vld [vmem:[%s6 + $0x70] sm:$0xff]
    %v676 = vld [vmem:[%s6 + $0x78] sm:$0xff]
    %v677 = vld [vmem:[%s7] sm:$0x1]
    %v679 = vlaneseq
    %v680 = vshrl.u32 %v679, 7
    %v681 = vsub.s32 0, %v680
    %v682 = vrot.slane %v677, %v681
    %684 = vmatprep.subr.mxu0 0.0
    %685 = vmatpush1.msra.mxu0 %v676
    %686 = vmatprep.subr.mxu0 0.0
    %687 = vmatpush1.msra.mxu0 %v675
    %688 = vmatprep.subr.mxu0 0.0
    %689 = vmatpush1.msra.mxu0 %v674
    %690 = vmatprep.subr.mxu0 0.0
    %691 = vmatpush1.msra.mxu0 %v673
    %692 = vmatprep.subr.mxu0 0.0
    %693 = vmatpush1.msra.mxu0 %v672
    %694 = vmatprep.subr.mxu0 0.0
    %695 = vmatpush1.msra.mxu0 %v671
    %696 = vmatprep.subr.mxu0 0.0
    %697 = vmatpush1.msra.mxu0 %v670
    %698 = vmatprep.subr.mxu0 0.0
    %699 = vmatpush1.msra.mxu0 %v669
    %700 = vmatprep.subr.mxu0 0.0
    %701 = vmatpush1.msra.mxu0 %v668
    %702 = vmatprep.subr.mxu0 0.0
    %703 = vmatpush1.msra.mxu0 %v667
    %704 = vmatprep.subr.mxu0 0.0
    %705 = vmatpush1.msra.mxu0 %v666
    %706 = vmatprep.subr.mxu0 0.0
    %707 = vmatpush1.msra.mxu0 %v665
    %708 = vmatprep.subr.mxu0 0.0
    %709 = vmatpush1.msra.mxu0 %v664
    %710 = vmatprep.subr.mxu0 0.0
    %711 = vmatpush1.msra.mxu0 %v663
    %712 = vmatprep.subr.mxu0 0.0
    %713 = vmatpush1.msra.mxu0 %v662
    %714 = vmatprep.subr.mxu0 0.0
    %715 = vmatpush1.msra.mxu0 %v661
    %716 = vmatprep.subr.mxu0 0.0
    %717 = vmatpush2.msra.mxu0 0.0
    %718 = vmatprep.subr.mxu0 0.0
    %719 = vmatpush2.msra.mxu0 0.0
    %720 = vmatprep.subr.mxu0 0.0
    %721 = vmatpush2.msra.mxu0 0.0
    %722 = vmatprep.subr.mxu0 0.0
    %723 = vmatpush2.msra.mxu0 0.0
    %724 = vmatprep.subr.mxu0 0.0
    %725 = vmatpush2.msra.mxu0 0.0
    %726 = vmatprep.subr.mxu0 0.0
    %727 = vmatpush2.msra.mxu0 0.0
    %728 = vmatprep.subr.mxu0 0.0
    %729 = vmatpush2.msra.mxu0 0.0
    %730 = vmatprep.subr.mxu0 0.0
    %731 = vmatpush2.msra.mxu0 0.0
    %732 = vmatprep.subr.mxu0 0.0
    %733 = vmatpush2.msra.mxu0 0.0
    %734 = vmatprep.subr.mxu0 0.0
    %735 = vmatpush2.msra.mxu0 0.0
    %736 = vmatprep.subr.mxu0 0.0
    %737 = vmatpush2.msra.mxu0 0.0
    %738 = vmatprep.subr.mxu0 0.0
    %739 = vmatpush2.msra.mxu0 0.0
    %740 = vmatprep.subr.mxu0 0.0
    %741 = vmatpush2.msra.mxu0 0.0
    %742 = vmatprep.subr.mxu0 0.0
    %743 = vmatpush2.msra.mxu0 0.0
    %744 = vmatprep.subr.mxu0 0.0
    %745 = vmatpush2.msra.mxu0 0.0
    %746 = vmatprep.subr.mxu0 0.0
    %747 = vmatpush2.msra.mxu0 0.0
    %748 = vmatprep.mubr.f32.mxu0 0.0
    %749 = vmatmul.mubr.f32.gmra.mxu0 %v599
    %v750 = vpop.f32.mrf.mxu0
    %v751 = vadd.f32 %v682, %v750
    %v752 = vpop.f32.mrf.mxu0
    %753 = vmatprep.mubr.f32.mxu0 0.0
    %754 = vmatmul.mubr.f32.gmra.mxu0 %v602
    %v755 = vpop.f32.mrf.mxu0
    %v756 = vadd.f32 %v682, %v755
    %v757 = vpop.f32.mrf.mxu0
    %758 = vmatprep.mubr.f32.mxu0 0.0
    %759 = vmatmul.mubr.f32.gmra.mxu0 %v607
    %v760 = vpop.f32.mrf.mxu0
    %v761 = vadd.f32 %v682, %v760
    %v762 = vpop.f32.mrf.mxu0
    %763 = vmatprep.mubr.f32.mxu0 0.0
    %764 = vmatmul.mubr.f32.gmra.mxu0 %v610
    %v765 = vpop.f32.mrf.mxu0
    %v766 = vadd.f32 %v682, %v765
    %v767 = vpop.f32.mrf.mxu0
    %768 = vmatprep.mubr.f32.mxu0 0.0
    %769 = vmatmul.mubr.f32.gmra.mxu0 %v615
    %v770 = vpop.f32.mrf.mxu0
    %v771 = vadd.f32 %v682, %v770
    %v772 = vpop.f32.mrf.mxu0
    %773 = vmatprep.mubr.f32.mxu0 0.0
    %774 = vmatmul.mubr.f32.gmra.mxu0 %v618
    %v775 = vpop.f32.mrf.mxu0
    %v776 = vadd.f32 %v682, %v775
    %v777 = vpop.f32.mrf.mxu0
    %778 = vmatprep.mubr.f32.mxu0 0.0
    %779 = vmatmul.mubr.f32.gmra.mxu0 %v623
    %v780 = vpop.f32.mrf.mxu0
    %v781 = vadd.f32 %v682, %v780
    %v782 = vpop.f32.mrf.mxu0
    %783 = vmatprep.mubr.f32.mxu0 0.0
    %784 = vmatmul.mubr.f32.gmra.mxu0 %v626
    %v785 = vpop.f32.mrf.mxu0
    %v786 = vadd.f32 %v682, %v785
    %v787 = vpop.f32.mrf.mxu0
    %788 = vmatprep.mubr.f32.mxu0 0.0
    %789 = vmatmul.mubr.f32.gmra.mxu0 %v631
    %v790 = vpop.f32.mrf.mxu0
    %v791 = vadd.f32 %v682, %v790
    %v792 = vpop.f32.mrf.mxu0
    %793 = vmatprep.mubr.f32.mxu0 0.0
    %794 = vmatmul.mubr.f32.gmra.mxu0 %v634
    %v795 = vpop.f32.mrf.mxu0
    %v796 = vadd.f32 %v682, %v795
    %v797 = vpop.f32.mrf.mxu0
    %798 = vmatprep.mubr.f32.mxu0 0.0
    %799 = vmatmul.mubr.f32.gmra.mxu0 %v639
    %v800 = vpop.f32.mrf.mxu0
    %v801 = vadd.f32 %v682, %v800
    %v802 = vpop.f32.mrf.mxu0
    %803 = vmatprep.mubr.f32.mxu0 0.0
    %804 = vmatmul.mubr.f32.gmra.mxu0 %v642
    %v805 = vpop.f32.mrf.mxu0
    %v806 = vadd.f32 %v682, %v805
    %v807 = vpop.f32.mrf.mxu0
    %808 = vmatprep.mubr.f32.mxu0 0.0
    %809 = vmatmul.mubr.f32.gmra.mxu0 %v647
    %v810 = vpop.f32.mrf.mxu0
    %v811 = vadd.f32 %v682, %v810
    %v812 = vpop.f32.mrf.mxu0
    %813 = vmatprep.mubr.f32.mxu0 0.0
    %814 = vmatmul.mubr.f32.gmra.mxu0 %v650
    %v815 = vpop.f32.mrf.mxu0
    %v816 = vadd.f32 %v682, %v815
    %v817 = vpop.f32.mrf.mxu0
    %818 = vmatprep.mubr.f32.mxu0 0.0
    %819 = vmatmul.mubr.f32.gmra.mxu0 %v655
    %v820 = vpop.f32.mrf.mxu0
    %v821 = vadd.f32 %v682, %v820
    %v822 = vpop.f32.mrf.mxu0
    %823 = vmatprep.mubr.f32.mxu0 0.0
    %824 = vmatmul.mubr.f32.gmra.mxu0 %v658
    %v825 = vpop.f32.mrf.mxu0
    %v826 = vadd.f32 %v682, %v825
    %v827 = vpop.f32.mrf.mxu0
    %828 = vdwg.mxu0
    %v829 = vpack.c.bf16 %v756, %v751
    %v830 = vpack.c.bf16 %v766, %v761
    %v831 = vpack.c.bf16 %v776, %v771
    %v832 = vpack.c.bf16 %v786, %v781
    %v833 = vpack.c.bf16 %v796, %v791
    %v834 = vpack.c.bf16 %v806, %v801
    %v835 = vpack.c.bf16 %v816, %v811
    %v836 = vpack.c.bf16 %v826, %v821
    %837 = vmatprep.subr.bf16.mxu0 0
    %838 = vmatpush1.bf16.msra.mxu0 %v836
    %839 = vmatprep.subr.bf16.mxu0 0
    %840 = vmatpush1.bf16.msra.mxu0 %v835
    %841 = vmatprep.subr.bf16.mxu0 0
    %842 = vmatpush1.bf16.msra.mxu0 %v834
    %843 = vmatprep.subr.bf16.mxu0 0
    %844 = vmatpush1.bf16.msra.mxu0 %v833
    %845 = vmatprep.subr.bf16.mxu0 0
    %846 = vmatpush1.bf16.msra.mxu0 %v832
    %847 = vmatprep.subr.bf16.mxu0 0
    %848 = vmatpush1.bf16.msra.mxu0 %v831
    %849 = vmatprep.subr.bf16.mxu0 0
    %850 = vmatpush1.bf16.msra.mxu0 %v830
    %851 = vmatprep.subr.bf16.mxu0 0
    %852 = vmatpush1.bf16.msra.mxu0 %v829
    %853 = vmatprep.subr.bf16.mxu0 0
    %854 = vmatpush2.bf16.msra.mxu0 0
    %855 = vmatprep.subr.bf16.mxu0 0
    %856 = vmatpush2.bf16.msra.mxu0 0
    %857 = vmatprep.subr.bf16.mxu0 0
    %858 = vmatpush2.bf16.msra.mxu0 0
    %859 = vmatprep.subr.bf16.mxu0 0
    %860 = vmatpush2.bf16.msra.mxu0 0
    %861 = vmatprep.subr.bf16.mxu0 0
    %862 = vmatpush2.bf16.msra.mxu0 0
    %863 = vmatprep.subr.bf16.mxu0 0
    %864 = vmatpush2.bf16.msra.mxu0 0
    %865 = vmatprep.subr.bf16.mxu0 0
    %866 = vmatpush2.bf16.msra.mxu0 0
    %867 = vmatprep.subr.bf16.mxu0 0
    %868 = vmatpush2.bf16.msra.mxu0 0
    %869 = vmatprep.mubr.bf16.mxu0 0
    %870 = vmatmul.mubr.bf16.gmra.mxu0 %v406
    %v871 = vpop.f32.mrf.mxu0
    %v872 = vadd.f32 0.0, %v871
    %v873 = vpop.f32.mrf.mxu0
    %v874 = vpop.f32.mrf.mxu0
    %v875 = vadd.f32 0.0, %v874
    %v876 = vpop.f32.mrf.mxu0
    %877 = vmatprep.mubr.bf16.mxu0 0
    %878 = vmatmul.mubr.bf16.gmra.mxu0 %v407
    %v879 = vpop.f32.mrf.mxu0
    %v880 = vadd.f32 0.0, %v879
    %v881 = vpop.f32.mrf.mxu0
    %v882 = vpop.f32.mrf.mxu0
    %v883 = vadd.f32 0.0, %v882
    %v884 = vpop.f32.mrf.mxu0
    %885 = vmatprep.mubr.bf16.mxu0 0
    %886 = vmatmul.mubr.bf16.gmra.mxu0 %v408
    %v887 = vpop.f32.mrf.mxu0
    %v888 = vadd.f32 0.0, %v887
    %v889 = vpop.f32.mrf.mxu0
    %v890 = vpop.f32.mrf.mxu0
    %v891 = vadd.f32 0.0, %v890
    %v892 = vpop.f32.mrf.mxu0
    %893 = vmatprep.mubr.bf16.mxu0 0
    %894 = vmatmul.mubr.bf16.gmra.mxu0 %v409
    %v895 = vpop.f32.mrf.mxu0
    %v896 = vadd.f32 0.0, %v895
    %v897 = vpop.f32.mrf.mxu0
    %v898 = vpop.f32.mrf.mxu0
    %v899 = vadd.f32 0.0, %v898
    %v900 = vpop.f32.mrf.mxu0
    %901 = vmatprep.mubr.bf16.mxu0 0
    %902 = vmatmul.mubr.bf16.gmra.mxu0 %v410
    %v903 = vpop.f32.mrf.mxu0
    %v904 = vadd.f32 0.0, %v903
    %v905 = vpop.f32.mrf.mxu0
    %v906 = vpop.f32.mrf.mxu0
    %v907 = vadd.f32 0.0, %v906
    %v908 = vpop.f32.mrf.mxu0
    %909 = vmatprep.mubr.bf16.mxu0 0
    %910 = vmatmul.mubr.bf16.gmra.mxu0 %v411
    %v911 = vpop.f32.mrf.mxu0
    %v912 = vadd.f32 0.0, %v911
    %v913 = vpop.f32.mrf.mxu0
    %v914 = vpop.f32.mrf.mxu0
    %v915 = vadd.f32 0.0, %v914
    %v916 = vpop.f32.mrf.mxu0
    %917 = vmatprep.mubr.bf16.mxu0 0
    %918 = vmatmul.mubr.bf16.gmra.mxu0 %v412
    %v919 = vpop.f32.mrf.mxu0
    %v920 = vadd.f32 0.0, %v919
    %v921 = vpop.f32.mrf.mxu0
    %v922 = vpop.f32.mrf.mxu0
    %v923 = vadd.f32 0.0, %v922
    %v924 = vpop.f32.mrf.mxu0
    %925 = vmatprep.mubr.bf16.mxu0 0
    %926 = vmatmul.mubr.bf16.gmra.mxu0 %v413
    %v927 = vpop.f32.mrf.mxu0
    %v928 = vadd.f32 0.0, %v927
    %v929 = vpop.f32.mrf.mxu0
    %v930 = vpop.f32.mrf.mxu0
    %v931 = vadd.f32 0.0, %v930
    %v932 = vpop.f32.mrf.mxu0
    %933 = vdwg.mxu0
    %v934 = vld [vmem:[%s8] sm:$0xff]
    %v935 = vld [vmem:[%s8 + $0x8] sm:$0xff]
    %v936 = vld [vmem:[%s8 + $0x10] sm:$0xff]
    %v937 = vld [vmem:[%s8 + $0x18] sm:$0xff]
    %v938 = vld [vmem:[%s8 + $0x20] sm:$0xff]
    %v939 = vld [vmem:[%s8 + $0x28] sm:$0xff]
    %v940 = vld [vmem:[%s8 + $0x30] sm:$0xff]
    %v941 = vld [vmem:[%s8 + $0x38] sm:$0xff]
    %v942 = vld [vmem:[%s8 + $0x40] sm:$0xff]
    %v943 = vld [vmem:[%s8 + $0x48] sm:$0xff]
    %v944 = vld [vmem:[%s8 + $0x50] sm:$0xff]
    %v945 = vld [vmem:[%s8 + $0x58] sm:$0xff]
    %v946 = vld [vmem:[%s8 + $0x60] sm:$0xff]
    %v947 = vld [vmem:[%s8 + $0x68] sm:$0xff]
    %v948 = vld [vmem:[%s8 + $0x70] sm:$0xff]
    %v949 = vld [vmem:[%s8 + $0x78] sm:$0xff]
    %v950 = vld [vmem:[%s9] sm:$0x1]
    %v952 = vlaneseq
    %v953 = vshrl.u32 %v952, 7
    %v954 = vsub.s32 0, %v953
    %v955 = vrot.slane %v950, %v954
    %957 = vmatprep.subr.mxu0 0.0
    %958 = vmatpush1.msra.mxu0 %v949
    %959 = vmatprep.subr.mxu0 0.0
    %960 = vmatpush1.msra.mxu0 %v948
    %961 = vmatprep.subr.mxu0 0.0
    %962 = vmatpush1.msra.mxu0 %v947
    %963 = vmatprep.subr.mxu0 0.0
    %964 = vmatpush1.msra.mxu0 %v946
    %965 = vmatprep.subr.mxu0 0.0
    %966 = vmatpush1.msra.mxu0 %v945
    %967 = vmatprep.subr.mxu0 0.0
    %968 = vmatpush1.msra.mxu0 %v944
    %969 = vmatprep.subr.mxu0 0.0
    %970 = vmatpush1.msra.mxu0 %v943
    %971 = vmatprep.subr.mxu0 0.0
    %972 = vmatpush1.msra.mxu0 %v942
    %973 = vmatprep.subr.mxu0 0.0
    %974 = vmatpush1.msra.mxu0 %v941
    %975 = vmatprep.subr.mxu0 0.0
    %976 = vmatpush1.msra.mxu0 %v940
    %977 = vmatprep.subr.mxu0 0.0
    %978 = vmatpush1.msra.mxu0 %v939
    %979 = vmatprep.subr.mxu0 0.0
    %980 = vmatpush1.msra.mxu0 %v938
    %981 = vmatprep.subr.mxu0 0.0
    %982 = vmatpush1.msra.mxu0 %v937
    %983 = vmatprep.subr.mxu0 0.0
    %984 = vmatpush1.msra.mxu0 %v936
    %985 = vmatprep.subr.mxu0 0.0
    %986 = vmatpush1.msra.mxu0 %v935
    %987 = vmatprep.subr.mxu0 0.0
    %988 = vmatpush1.msra.mxu0 %v934
    %989 = vmatprep.subr.mxu0 0.0
    %990 = vmatpush2.msra.mxu0 0.0
    %991 = vmatprep.subr.mxu0 0.0
    %992 = vmatpush2.msra.mxu0 0.0
    %993 = vmatprep.subr.mxu0 0.0
    %994 = vmatpush2.msra.mxu0 0.0
    %995 = vmatprep.subr.mxu0 0.0
    %996 = vmatpush2.msra.mxu0 0.0
    %997 = vmatprep.subr.mxu0 0.0
    %998 = vmatpush2.msra.mxu0 0.0
    %999 = vmatprep.subr.mxu0 0.0
    %1000 = vmatpush2.msra.mxu0 0.0
    %1001 = vmatprep.subr.mxu0 0.0
    %1002 = vmatpush2.msra.mxu0 0.0
    %1003 = vmatprep.subr.mxu0 0.0
    %1004 = vmatpush2.msra.mxu0 0.0
    %1005 = vmatprep.subr.mxu0 0.0
    %1006 = vmatpush2.msra.mxu0 0.0
    %1007 = vmatprep.subr.mxu0 0.0
    %1008 = vmatpush2.msra.mxu0 0.0
    %1009 = vmatprep.subr.mxu0 0.0
    %1010 = vmatpush2.msra.mxu0 0.0
    %1011 = vmatprep.subr.mxu0 0.0
    %1012 = vmatpush2.msra.mxu0 0.0
    %1013 = vmatprep.subr.mxu0 0.0
    %1014 = vmatpush2.msra.mxu0 0.0
    %1015 = vmatprep.subr.mxu0 0.0
    %1016 = vmatpush2.msra.mxu0 0.0
    %1017 = vmatprep.subr.mxu0 0.0
    %1018 = vmatpush2.msra.mxu0 0.0
    %1019 = vmatprep.subr.mxu0 0.0
    %1020 = vmatpush2.msra.mxu0 0.0
    %1021 = vmatprep.mubr.f32.mxu0 0.0
    %1022 = vmatmul.mubr.f32.gmra.mxu0 %v872
    %v1023 = vpop.f32.mrf.mxu0
    %v1024 = vadd.f32 %v955, %v1023
    %v1025 = vpop.f32.mrf.mxu0
    %1026 = vmatprep.mubr.f32.mxu0 0.0
    %1027 = vmatmul.mubr.f32.gmra.mxu0 %v875
    %v1028 = vpop.f32.mrf.mxu0
    %v1029 = vadd.f32 %v955, %v1028
    %v1030 = vpop.f32.mrf.mxu0
    %1031 = vmatprep.mubr.f32.mxu0 0.0
    %1032 = vmatmul.mubr.f32.gmra.mxu0 %v880
    %v1033 = vpop.f32.mrf.mxu0
    %v1034 = vadd.f32 %v955, %v1033
    %v1035 = vpop.f32.mrf.mxu0
    %1036 = vmatprep.mubr.f32.mxu0 0.0
    %1037 = vmatmul.mubr.f32.gmra.mxu0 %v883
    %v1038 = vpop.f32.mrf.mxu0
    %v1039 = vadd.f32 %v955, %v1038
    %v1040 = vpop.f32.mrf.mxu0
    %1041 = vmatprep.mubr.f32.mxu0 0.0
    %1042 = vmatmul.mubr.f32.gmra.mxu0 %v888
    %v1043 = vpop.f32.mrf.mxu0
    %v1044 = vadd.f32 %v955, %v1043
    %v1045 = vpop.f32.mrf.mxu0
    %1046 = vmatprep.mubr.f32.mxu0 0.0
    %1047 = vmatmul.mubr.f32.gmra.mxu0 %v891
    %v1048 = vpop.f32.mrf.mxu0
    %v1049 = vadd.f32 %v955, %v1048
    %v1050 = vpop.f32.mrf.mxu0
    %1051 = vmatprep.mubr.f32.mxu0 0.0
    %1052 = vmatmul.mubr.f32.gmra.mxu0 %v896
    %v1053 = vpop.f32.mrf.mxu0
    %v1054 = vadd.f32 %v955, %v1053
    %v1055 = vpop.f32.mrf.mxu0
    %1056 = vmatprep.mubr.f32.mxu0 0.0
    %1057 = vmatmul.mubr.f32.gmra.mxu0 %v899
    %v1058 = vpop.f32.mrf.mxu0
    %v1059 = vadd.f32 %v955, %v1058
    %v1060 = vpop.f32.mrf.mxu0
    %1061 = vmatprep.mubr.f32.mxu0 0.0
    %1062 = vmatmul.mubr.f32.gmra.mxu0 %v904
    %v1063 = vpop.f32.mrf.mxu0
    %v1064 = vadd.f32 %v955, %v1063
    %v1065 = vpop.f32.mrf.mxu0
    %1066 = vmatprep.mubr.f32.mxu0 0.0
    %1067 = vmatmul.mubr.f32.gmra.mxu0 %v907
    %v1068 = vpop.f32.mrf.mxu0
    %v1069 = vadd.f32 %v955, %v1068
    %v1070 = vpop.f32.mrf.mxu0
    %1071 = vmatprep.mubr.f32.mxu0 0.0
    %1072 = vmatmul.mubr.f32.gmra.mxu0 %v912
    %v1073 = vpop.f32.mrf.mxu0
    %v1074 = vadd.f32 %v955, %v1073
    %v1075 = vpop.f32.mrf.mxu0
    %1076 = vmatprep.mubr.f32.mxu0 0.0
    %1077 = vmatmul.mubr.f32.gmra.mxu0 %v915
    %v1078 = vpop.f32.mrf.mxu0
    %v1079 = vadd.f32 %v955, %v1078
    %v1080 = vpop.f32.mrf.mxu0
    %1081 = vmatprep.mubr.f32.mxu0 0.0
    %1082 = vmatmul.mubr.f32.gmra.mxu0 %v920
    %v1083 = vpop.f32.mrf.mxu0
    %v1084 = vadd.f32 %v955, %v1083
    %v1085 = vpop.f32.mrf.mxu0
    %1086 = vmatprep.mubr.f32.mxu0 0.0
    %1087 = vmatmul.mubr.f32.gmra.mxu0 %v923
    %v1088 = vpop.f32.mrf.mxu0
    %v1089 = vadd.f32 %v955, %v1088
    %v1090 = vpop.f32.mrf.mxu0
    %1091 = vmatprep.mubr.f32.mxu0 0.0
    %1092 = vmatmul.mubr.f32.gmra.mxu0 %v928
    %v1093 = vpop.f32.mrf.mxu0
    %v1094 = vadd.f32 %v955, %v1093
    %v1095 = vpop.f32.mrf.mxu0
    %1096 = vmatprep.mubr.f32.mxu0 0.0
    %1097 = vmatmul.mubr.f32.gmra.mxu0 %v931
    %v1098 = vpop.f32.mrf.mxu0
    %v1099 = vadd.f32 %v955, %v1098
    %v1100 = vpop.f32.mrf.mxu0
    %1101 = vdwg.mxu0
    %1102 = vst [vmem:[#allocation2] sm:$0xff] %v1024
    %1103 = vst [vmem:[#allocation2 + $0x8] sm:$0xff] %v1029
    %1104 = vst [vmem:[#allocation2 + $0x10] sm:$0xff] %v1034
    %1105 = vst [vmem:[#allocation2 + $0x18] sm:$0xff] %v1039
    %1106 = vst [vmem:[#allocation2 + $0x20] sm:$0xff] %v1044
    %1107 = vst [vmem:[#allocation2 + $0x28] sm:$0xff] %v1049
    %1108 = vst [vmem:[#allocation2 + $0x30] sm:$0xff] %v1054
    %1109 = vst [vmem:[#allocation2 + $0x38] sm:$0xff] %v1059
    %1110 = vst [vmem:[#allocation2 + $0x40] sm:$0xff] %v1064
    %1111 = vst [vmem:[#allocation2 + $0x48] sm:$0xff] %v1069
    %1112 = vst [vmem:[#allocation2 + $0x50] sm:$0xff] %v1074
    %1113 = vst [vmem:[#allocation2 + $0x58] sm:$0xff] %v1079
    %1114 = vst [vmem:[#allocation2 + $0x60] sm:$0xff] %v1084
    %1115 = vst [vmem:[#allocation2 + $0x68] sm:$0xff] %v1089
    %1116 = vst [vmem:[#allocation2 + $0x70] sm:$0xff] %v1094
    %1117 = vst [vmem:[#allocation2 + $0x78] sm:$0xff] %v1099
    // Predicated region
    $region42: #{tpu_custom_call.1} parent=1 // pred_check
      _
    $region43: #{tpu_custom_call.1} parent=1 // pred_check_branch
      %1119 = sbr.rel (0) target = $region45
    $region44: #{tpu_custom_call.1} parent=1 // pred_region
      %s1121 = ssub.s32 2048, 2048
      %1122 = vsyncadd [#allocation3], %s1121
      %s1123 = sshll.u32 [#allocation2], 4
      %s1124 = int_to_ptr.vmem [resolvable:$true] %s1123
      %1129 = dma.vmem_to_hbm [thread:$0]  %s1124, 2048, %s10, [#allocation3], 128, 128, 8
    $region45: #{tpu_custom_call.1} parent=1 // pred_fallthru
      _
    // Predicated region
    $region46: #{tpu_custom_call.1} parent=1 // pred_check
      _
    $region47: #{tpu_custom_call.1} parent=1 // pred_check_branch
      %1131 = sbr.rel (0) target = $region49
    $region48: #{tpu_custom_call.1} parent=1 // pred_region
      %1132 = dma.done [#allocation3], 2048
    $region49: #{tpu_custom_call.1} parent=1 // pred_fallthru
      _
    %1133 = vsyncpa [#allocation3], 1

</llo_original>
